<compile_context>
chip_gen: v7x
topology: tpu7x:2x2x1
jax: 0.10.0
libtpu: 0.0.40
codegen_flags: <defaults>
</compile_context>

<pallas_src>
import math

import jax
import jax.numpy as jnp
from jax.experimental import pallas as pl
from jax.experimental.pallas import tpu as pltpu


def _round_up(a, b):
    return (a + b - 1) // b * b


def _tpu_defaults():
    """Generation-aware tile defaults.

    v5e/v6e (128 MiB VMEM): tm=512, tn=1024 (halves x re-streaming from HBM,
    matters most on v5e's ~0.8 TB/s HBM).  v7x (64 MiB VMEM/core): tm=256,
    tn=512.
    """
    vmem_cap = 64 << 20
    try:
        vmem_cap = int(pltpu.get_tpu_info().vmem_capacity_bytes)
    except Exception:
        pass
    if vmem_cap >= (96 << 20):      # v5e / v6e
        tm, tn = 512, 1024
    else:                           # v7x
        tm, tn = 256, 512
    return tm, tn, vmem_cap


def _sublane_pack(dtype):
    itemsize = jnp.dtype(dtype).itemsize
    return {4: 8, 2: 16, 1: 32}.get(itemsize, 8)


def _gelu_f32(gate, approximate):
    """GELU on an f32 tile (epilogue stays f32 on every generation)."""
    if approximate:
        # tanh-approx GELU -> EUP (otherwise-idle bundle slot) instead of a
        # long erf polynomial occupying the 4 VALU slots.
        c = math.sqrt(2.0 / math.pi)
        return 0.5 * gate * (1.0 + jnp.tanh(c * (gate + 0.044715 * gate * gate * gate)))
    return 0.5 * gate * (1.0 + jax.lax.erf(gate * (1.0 / math.sqrt(2.0))))


def _make_geglu_kernel(tn, approximate):
    """K resident: single wide MXU matmul per tile, split val/gate in-register."""

    def kernel(x_ref, w_ref, b_ref, o_ref):
        # x_ref: (tm, K), w_ref: (K, 2*tn) = [Wv_j | Wg_j], b_ref: (1, 2*tn)
        acc = jnp.dot(x_ref[...], w_ref[...], preferred_element_type=jnp.float32)
        acc = acc + b_ref[...].astype(jnp.float32)
        val = acc[:, :tn]
        gate = acc[:, tn:]
        o_ref[...] = (val * _gelu_f32(gate, approximate)).astype(o_ref.dtype)

    return kernel


def _make_geglu_kernel_ktiled(tn, approximate):
    """K tiled: innermost 'arbitrary' axis with an f32 VMEM accumulator."""

    def kernel(x_ref, w_ref, b_ref, o_ref, acc_ref):
        k = pl.program_id(2)

        @pl.when(k == 0)
        def _():
            acc_ref[...] = jnp.zeros_like(acc_ref)

        acc_ref[...] += jnp.dot(
            x_ref[...], w_ref[...], preferred_element_type=jnp.float32
        )

        @pl.when(k == pl.num_programs(2) - 1)
        def _():
            acc = acc_ref[...] + b_ref[...].astype(jnp.float32)
            val = acc[:, :tn]
            gate = acc[:, tn:]
            o_ref[...] = (val * _gelu_f32(gate, approximate)).astype(o_ref.dtype)

    return kernel


def prepare_geglu_params(weight, bias, *, tn=None, param_dtype=jnp.bfloat16):
    """One-time rearrangement of nn.Linear(dim_in, 2*dim_out) params.

    weight: (2*dim_out, dim_in)  -- PyTorch layout
    bias:   (2*dim_out,)

    Returns (w_fused, b_fused, dim_out, tn) where:
      w_fused: (dim_in, 2*n_pad); column block [j*2*tn, (j+1)*2*tn) holds
               [Wv tile j | Wg tile j] (transposed, zero-padded, cast to
               param_dtype -- bf16 by default for the MXU fast path).
      b_fused: (1, 2*n_pad) laid out the same way (kept f32 for the epilogue).

    Call this once at parameter-init time, NOT per forward call.
    """
    two_dim_out, dim_in = weight.shape
    assert two_dim_out % 2 == 0
    dim_out = two_dim_out // 2

    if tn is None:
        _, tn, _ = _tpu_defaults()
    tn = min(int(tn), _round_up(dim_out, 128))   # multiple of 128 -> lane-dense
    n_pad = _round_up(dim_out, tn)
    n_tiles = n_pad // tn

    if param_dtype is None:
        param_dtype = weight.dtype

    wv = weight[:dim_out, :].T        # (dim_in, dim_out)  "value" half
    wg = weight[dim_out:, :].T        # (dim_in, dim_out)  "gate" half
    bv = bias[:dim_out]
    bg = bias[dim_out:]
    pad = n_pad - dim_out
    if pad:
        wv = jnp.pad(wv, ((0, 0), (0, pad)))
        wg = jnp.pad(wg, ((0, 0), (0, pad)))
        bv = jnp.pad(bv, (0, pad))
        bg = jnp.pad(bg, (0, pad))

    w_fused = jnp.concatenate(
        [wv.reshape(dim_in, n_tiles, tn), wg.reshape(dim_in, n_tiles, tn)],
        axis=-1,
    ).reshape(dim_in, 2 * n_pad).astype(param_dtype)

    b_fused = jnp.concatenate(
        [bv.reshape(n_tiles, tn), bg.reshape(n_tiles, tn)], axis=-1
    ).reshape(1, 2 * n_pad).astype(jnp.float32)

    return w_fused, b_fused, dim_out, tn


def _pick_k_block(dim_in, tm_eff, tn, xb, wb, vmem_cap, k_block):
    """Decide whether (and how) to tile the contraction dimension."""
    if k_block is not None:
        tk = int(k_block)
        if tk % 128 == 0 and tk < dim_in and dim_in % tk == 0:
            return tk
        return None
    # Resident (double-buffered) x + weight blocks vs ~60% of VMEM.
    resident = 2 * (tm_eff * dim_in * xb + dim_in * 2 * tn * wb)
    if resident <= 0.6 * vmem_cap:
        return None
    for tk in (2048, 1024, 512, 256, 128):
        if tk < dim_in and dim_in % tk == 0:
            return tk
    return None


def geglu(x, w_fused, b_fused, dim_out, tn, *, tm=None, k_block=None,
          gelu_approximate=True):
    """GEGLU forward: x (..., dim_in) -> (..., dim_out)."""
    *lead, dim_in = x.shape
    assert dim_in == w_fused.shape[0]
    two_n_pad = w_fused.shape[1]
    n_pad = two_n_pad // 2
    assert n_pad % tn == 0
    n_tiles = n_pad // tn

    tm_default, _, vmem_cap = _tpu_defaults()
    if tm is None:
        tm = tm_default

    out_dtype = x.dtype
    compute_dtype = w_fused.dtype          # bf16 by default: both MXU operands bf16
    m = math.prod(lead) if lead else 1
    x2d = x.reshape(m, dim_in).astype(compute_dtype)

    xb = jnp.dtype(compute_dtype).itemsize
    wb = jnp.dtype(w_fused.dtype).itemsize
    ob = jnp.dtype(out_dtype).itemsize

    pack = _sublane_pack(compute_dtype)    # 8 f32 / 16 bf16 / 32 int8-fp8
    tm_eff = min(int(tm), _round_up(m, pack))
    m_pad = _round_up(m, tm_eff)
    if m_pad != m:
        x2d = jnp.pad(x2d, ((0, m_pad - m), (0, 0)))
    m_tiles = m_pad // tm_eff

    tk = _pick_k_block(dim_in, tm_eff, tn, xb, wb, vmem_cap, k_block)
    k_tiled = tk is not None
    k_blk = tk if k_tiled else dim_in
    k_tiles = dim_in // k_blk

    # Megacore balance: if there is only one N tile, make M the outer
    # "parallel" axis so both v7x TensorCores get work.
    m_outer = (n_tiles == 1 and m_tiles > 1)

    if k_tiled:
        if m_outer:
            grid = (m_tiles, n_tiles, k_tiles)
            x_map = lambda i, j, k: (i, k)
            w_map = lambda i, j, k: (k, j)
            b_map = lambda i, j, k: (0, j)
            o_map = lambda i, j, k: (i, j)
        else:
            grid = (n_tiles, m_tiles, k_tiles)
            x_map = lambda j, i, k: (i, k)
            w_map = lambda j, i, k: (k, j)
            b_map = lambda j, i, k: (0, j)
            o_map = lambda j, i, k: (i, j)
        semantics = ("parallel", "parallel", "arbitrary")
        kernel = _make_geglu_kernel_ktiled(tn, gelu_approximate)
        scratch = [pltpu.VMEM((tm_eff, 2 * tn), jnp.float32)]
    else:
        if m_outer:
            grid = (m_tiles, n_tiles)
            x_map = lambda i, j: (i, 0)
            w_map = lambda i, j: (0, j)
            b_map = lambda i, j: (0, j)
            o_map = lambda i, j: (i, j)
        else:
            # N outer, M inner: the weight/bias block index is constant across
            # the inner M sweep, so they stay resident per N tile.
            grid = (n_tiles, m_tiles)
            x_map = lambda j, i: (i, 0)
            w_map = lambda j, i: (0, j)
            b_map = lambda j, i: (0, j)
            o_map = lambda j, i: (i, j)
        semantics = ("parallel", "parallel")
        kernel = _make_geglu_kernel(tn, gelu_approximate)
        scratch = []

    # VMEM budget: double-buffered pipelined blocks + accumulator scratch +
    # the in-kernel f32 matmul result / val / gate / gelu temporaries.
    est = 2 * (tm_eff * k_blk * xb            # x block
               + k_blk * 2 * tn * wb          # fused weight block
               + 8 * 2 * tn * 4               # bias block (sublane-padded)
               + tm_eff * tn * ob)            # output block
    if k_tiled:
        est += tm_eff * 2 * tn * 4            # f32 accumulator scratch
    est += 4 * tm_eff * tn * 4                # (tm, 2*tn) f32 result + temps
    # Leave 8 MiB headroom below physical for Mosaic internal scratch (v7x).
    vmem_limit = max(32 << 20, min(int(est * 1.25) + (4 << 20),
                                   vmem_cap - (8 << 20)))

    cost = pl.CostEstimate(
        flops=2 * m_pad * dim_in * 2 * n_pad,
        transcendentals=m_pad * n_pad,
        bytes_accessed=(m_pad * dim_in * xb * n_tiles
                        + dim_in * 2 * n_pad * wb
                        + m_pad * n_pad * ob),
    )

    out_pad = pl.pallas_call(
        kernel,
        out_shape=jax.ShapeDtypeStruct((m_pad, n_pad), out_dtype),
        grid=grid,
        in_specs=[
            pl.BlockSpec((tm_eff, k_blk), x_map),
            pl.BlockSpec((k_blk, 2 * tn), w_map),
            pl.BlockSpec((1, 2 * tn), b_map),
        ],
        out_specs=pl.BlockSpec((tm_eff, tn), o_map),
        scratch_shapes=scratch,
        compiler_params=pltpu.CompilerParams(
            dimension_semantics=semantics,
            vmem_limit_bytes=vmem_limit,
        ),
        cost_estimate=cost,
    )(x2d, w_fused, b_fused)

    if m_pad != m or n_pad != dim_out:
        out_pad = out_pad[:m, :dim_out]
    return out_pad.reshape(*lead, dim_out)


def _geglu_ref(x, weight, bias):
    """Pure-JAX f32 reference matching the PyTorch GEGLU module (erf GELU)."""
    proj = x @ weight.T + bias
    dim_out = weight.shape[0] // 2
    val, gate = proj[..., :dim_out], proj[..., dim_out:]
    return val * jax.nn.gelu(gate, approximate=False)


if __name__ == "__main__":
    key = jax.random.PRNGKey(0)

    def make_case(k, batch, seq, dim_in, dim_out):
        kx, kw, kb = jax.random.split(k, 3)
        x = jax.random.normal(kx, (batch, seq, dim_in), dtype=jnp.float32)
        bound = 1.0 / math.sqrt(dim_in)
        weight = jax.random.uniform(
            kw, (2 * dim_out, dim_in), minval=-bound, maxval=bound,
            dtype=jnp.float32)
        bias = jax.random.uniform(
            kb, (2 * dim_out,), minval=-bound, maxval=bound, dtype=jnp.float32)
        return x, weight, bias

    k1, k2 = jax.random.split(key)

    # Case 1: AttentionLayers' FeedForward(glu=True) shapes: dim=32,
    # inner_dim = 4*dim = 128, batch=2, seq=8 (K-resident path).
    x, weight, bias = make_case(k1, 2, 8, 32, 128)
    w_fused, b_fused, d_out, tn = prepare_geglu_params(weight, bias)  # bf16 weights
    out = jax.block_until_ready(geglu(x, w_fused, b_fused, d_out, tn))
    ref = _geglu_ref(x, weight, bias)
    assert out.shape == ref.shape
    # Tolerance covers bf16 matmul operands + tanh-approx GELU vs f32 erf ref.
    assert jnp.allclose(out, ref, atol=5e-2, rtol=5e-2), "case 1 mismatch"

    # Case 2: exercise the K-tiled accumulator path (dim_in=256, k_block=128).
    x2, weight2, bias2 = make_case(k2, 2, 64, 256, 128)
    w2, b2, d2, tn2 = prepare_geglu_params(weight2, bias2)
    out2 = jax.block_until_ready(geglu(x2, w2, b2, d2, tn2, k_block=128))
    ref2 = _geglu_ref(x2, weight2, bias2)
    assert out2.shape == ref2.shape
    assert jnp.allclose(out2, ref2, atol=5e-2, rtol=5e-2), "case 2 mismatch"

    print("KERNEL_OK")
</pallas_src>

<mosaic_0001>
module attributes {stable_mosaic.version = 11 : i64} {
  func.func @kernel(%arg0: i32, %arg1: i32, %arg2: memref<16x32xbf16, #tpu.memory_space<vmem>>, %arg3: memref<32x256xbf16, #tpu.memory_space<vmem>>, %arg4: memref<1x256xf32, #tpu.memory_space<vmem>>, %arg5: memref<16x128xf32, #tpu.memory_space<vmem>>) attributes {dimension_semantics = [#tpu.dimension_semantics<parallel>, #tpu.dimension_semantics<parallel>], iteration_bounds = array<i64: 1, 1>, scalar_prefetch = 0 : i64, scratch_operands = 0 : i64, tpu.core_type = #tpu.core_type<tc>, window_params = [{transform_indices = @transform_0, window_bounds = array<i64: 16, 32>}, {transform_indices = @transform_1, window_bounds = array<i64: 32, 256>}, {transform_indices = @transform_2, window_bounds = array<i64: 1, 256>}, {transform_indices = @transform_3, window_bounds = array<i64: 16, 128>}]} {
    %c0 = arith.constant 0 : index
    %c0_0 = arith.constant 0 : index
    %0 = vector.load %arg2[%c0, %c0_0] : memref<16x32xbf16, #tpu.memory_space<vmem>>, vector<16x32xbf16>
    %c0_1 = arith.constant 0 : index
    %c0_2 = arith.constant 0 : index
    %1 = vector.load %arg3[%c0_1, %c0_2] : memref<32x256xbf16, #tpu.memory_space<vmem>>, vector<32x256xbf16>
    %cst = arith.constant dense<0.000000e+00> : vector<16x256xf32>
    %2 = tpu.matmul %0, %1, %cst {dimension_numbers = #tpu.dot_dimension_numbers<[1], [0], [0], [1], [0, 0, 1, 1], [], []>} : vector<16x32xbf16>, vector<32x256xbf16>, vector<16x256xf32> -> vector<16x256xf32>
    %c0_3 = arith.constant 0 : index
    %c0_4 = arith.constant 0 : index
    %3 = vector.load %arg4[%c0_3, %c0_4] : memref<1x256xf32, #tpu.memory_space<vmem>>, vector<1x256xf32>
    %4 = vector.broadcast %3 : vector<1x256xf32> to vector<16x256xf32>
    %5 = arith.addf %2, %4 : vector<16x256xf32>
    %6 = vector.extract_strided_slice %5 {offsets = [0, 0], sizes = [16, 128], strides = [1, 1]} : vector<16x256xf32> to vector<16x128xf32>
    %7 = vector.extract_strided_slice %5 {offsets = [0, 128], sizes = [16, 128], strides = [1, 1]} : vector<16x256xf32> to vector<16x128xf32>
    %cst_5 = arith.constant 5.000000e-01 : f32
    %8 = vector.broadcast %cst_5 : f32 to vector<16x128xf32>
    %9 = arith.mulf %8, %7 : vector<16x128xf32>
    %cst_6 = arith.constant 4.471500e-02 : f32
    %10 = vector.broadcast %cst_6 : f32 to vector<16x128xf32>
    %11 = arith.mulf %10, %7 : vector<16x128xf32>
    %12 = arith.mulf %11, %7 : vector<16x128xf32>
    %13 = arith.mulf %12, %7 : vector<16x128xf32>
    %14 = arith.addf %7, %13 : vector<16x128xf32>
    %cst_7 = arith.constant 0.797884583 : f32
    %15 = vector.broadcast %cst_7 : f32 to vector<16x128xf32>
    %16 = arith.mulf %15, %14 : vector<16x128xf32>
    %17 = math.tanh %16 : vector<16x128xf32>
    %cst_8 = arith.constant 1.000000e+00 : f32
    %18 = vector.broadcast %cst_8 : f32 to vector<16x128xf32>
    %19 = arith.addf %18, %17 : vector<16x128xf32>
    %20 = arith.mulf %9, %19 : vector<16x128xf32>
    %21 = arith.mulf %6, %20 : vector<16x128xf32>
    %c0_9 = arith.constant 0 : index
    %c0_10 = arith.constant 0 : index
    %22 = vector.load %arg5[%c0_9, %c0_10] : memref<16x128xf32, #tpu.memory_space<vmem>>, vector<16x128xf32>
    tpu.vector_store %arg5[%c0_9, %c0_10], %21 {strides = array<i32>} : memref<16x128xf32, #tpu.memory_space<vmem>>, vector<16x128xf32>,
    return
  }
  func.func @transform_0(%arg0: i32, %arg1: i32) -> (i32, i32) {
    %c0_i32 = arith.constant 0 : i32
    %c0_i32_0 = arith.constant 0 : i32
    return %arg1, %c0_i32 : i32, i32
  }
  func.func @transform_1(%arg0: i32, %arg1: i32) -> (i32, i32) {
    %c0_i32 = arith.constant 0 : i32
    %c0_i32_0 = arith.constant 0 : i32
    return %c0_i32, %arg0 : i32, i32
  }
  func.func @transform_2(%arg0: i32, %arg1: i32) -> (i32, i32) {
    %c0_i32 = arith.constant 0 : i32
    %c0_i32_0 = arith.constant 0 : i32
    return %c0_i32, %arg0 : i32, i32
  }
  func.func @transform_3(%arg0: i32, %arg1: i32) -> (i32, i32) {
    %c0_i32 = arith.constant 0 : i32
    return %arg1, %arg0 : i32, i32
  }
}

</mosaic_0001>

<llo_original>
// kernel: tpu_custom_call.1
$region0: #{tpu_custom_call.1}
  #allocation0 [shape = 'u32[]', space=smem, size = 0x4, offset = 0x4, fixed_abs, tag = 'smem constant byte address 0x4 - core index']
  #allocation1 [shape = 'u32[144,128]{1,0:T(1,128)}', space=vmem, size = 0x12000, scoped, tag = 'internal scratch']
  %s0 = inlined_call_operand.hbm [shape: bf16[16,32], index: 0, kind: input, shape index: {}]
  %s1 = inlined_call_operand.hbm [shape: bf16[32,256], index: 1, kind: input, shape index: {}]
  %s2 = inlined_call_operand.vmem [shape: f32[1,256], index: 2, kind: input, shape index: {}]
  %s3 = inlined_call_operand.hbm [shape: f32[16,128], index: 3, kind: output, shape index: {}]
  %s4 = sld [smem:[#allocation0]]
  $region30: #{tpu_custom_call.1} parent=0
    _
  %s6 = ssub.s32 1, %s4
  %s7 = scalar_select 0, %s6, %s4
  $region1: #{tpu_custom_call.1} parent=0
    #allocation2 [shape = 'u8[4096]{0}', space=vmem, size = 0x1000, scoped, tag = 'input window, operand 0, single buffered']
    #allocation3 [shape = 's32[1]{0}', space=sflag, size = 0x4, scoped, tag = 'scoped memory for tpu_custom_call.1']
    #allocation4 [shape = 's32[1]{0}', space=sflag, size = 0x4, scoped, tag = 'scoped memory for tpu_custom_call.1']
    #allocation5 [shape = 'u8[16384]{0}', space=vmem, size = 0x4000, scoped, tag = 'input window, operand 1, single buffered']
    #allocation6 [shape = 's32[1]{0}', space=sflag, size = 0x4, scoped, tag = 'scoped memory for tpu_custom_call.1']
    #allocation7 [shape = 'u8[8192]{0}', space=vmem, size = 0x2000, scoped, tag = 'output window, operand 0, single buffered']
    %8 = vsyncpa [#allocation3], 0
    %9 = vsyncpa [#allocation6], 0
    %10 = vsyncpa [#allocation4], 0
    // Predicated region
    $region2: #{tpu_custom_call.1} parent=1 // pred_check
      _
    $region3: #{tpu_custom_call.1} parent=1 // pred_check_branch
      %12 = sbr.rel (0) target = $region5
    $region4: #{tpu_custom_call.1} parent=1 // pred_region
      %s14 = ssub.s32 128, 128
      %15 = vsyncadd [#allocation3], %s14
      %s16 = sshll.u32 [#allocation2], 4
      %s17 = int_to_ptr.vmem [resolvable:$true] %s16
      %22 = dma.hbm_to_vmem [thread:$0]  %s0, 128, %s17, [#allocation3], 64, 64, 4
    $region5: #{tpu_custom_call.1} parent=1 // pred_fallthru
      _
    // Predicated region
    $region6: #{tpu_custom_call.1} parent=1 // pred_check
      _
    $region7: #{tpu_custom_call.1} parent=1 // pred_check_branch
      %24 = sbr.rel (0) target = $region9
    $region8: #{tpu_custom_call.1} parent=1 // pred_region
      %s26 = ssub.s32 512, 512
      %27 = vsyncadd [#allocation6], %s26
      %s28 = sshll.u32 [#allocation5], 4
      %s29 = int_to_ptr.vmem [resolvable:$true] %s28
      %34 = dma.hbm_to_vmem [thread:$0]  %s1, 512, %s29, [#allocation6], 128, 128, 8
    $region9: #{tpu_custom_call.1} parent=1 // pred_fallthru
      _
    // Predicated region
    $region10: #{tpu_custom_call.1} parent=1 // pred_check
      _
    $region11: #{tpu_custom_call.1} parent=1 // pred_check_branch
      %36 = sbr.rel (0) target = $region13
    $region12: #{tpu_custom_call.1} parent=1 // pred_region
      _
    $region13: #{tpu_custom_call.1} parent=1 // pred_fallthru
      _
    // Predicated region
    $region14: #{tpu_custom_call.1} parent=1 // pred_check
      _
    $region15: #{tpu_custom_call.1} parent=1 // pred_check_branch
      %38 = sbr.rel (0) target = $region17
    $region16: #{tpu_custom_call.1} parent=1 // pred_region
      %39 = dma.done [#allocation3], 128
    $region17: #{tpu_custom_call.1} parent=1 // pred_fallthru
      _
    // Predicated region
    $region18: #{tpu_custom_call.1} parent=1 // pred_check
      _
    $region19: #{tpu_custom_call.1} parent=1 // pred_check_branch
      %41 = sbr.rel (0) target = $region21
    $region20: #{tpu_custom_call.1} parent=1 // pred_region
      %42 = dma.done [#allocation6], 512
    $region21: #{tpu_custom_call.1} parent=1 // pred_fallthru
      _
    %v44 = vld [vmem:[#allocation2] sm:$0xf]
    %v45 = vld [vmem:[#allocation2 + $0x4] sm:$0xf]
    %v46 = vld [vmem:[#allocation5] sm:$0xff]
    %v47 = vld [vmem:[#allocation5 + $0x8] sm:$0xff]
    %v48 = vld [vmem:[#allocation5 + $0x10] sm:$0xff]
    %v49 = vld [vmem:[#allocation5 + $0x18] sm:$0xff]
    %v50 = vld [vmem:[%s2] sm:$0x3]
    %v52 = vlaneseq
    %v53 = vshrl.u32 %v52, 7
    %v54 = vsub.s32 0, %v53
    %v55 = vrot.slane %v50, %v54
    %v56 = vlaneseq
    %v57 = vshrl.u32 %v56, 7
    %v58 = vsub.s32 1, %v57
    %v59 = vrot.slane %v50, %v58
    %v64 = vunpack.c.l.b16 %v44
    %v65 = vunpack.c.l.b16 %v45
    %v66 = vpack.c.b16 %v65, %v64
    %v71 = vunpack.c.l.b16 %v46
    %v72 = vunpack.c.h.b16 %v46
    %v73 = vunpack.c.l.b16 %v47
    %v74 = vunpack.c.h.b16 %v47
    %v75 = vunpack.c.l.b16 %v48
    %v76 = vunpack.c.h.b16 %v48
    %v77 = vunpack.c.l.b16 %v49
    %v78 = vunpack.c.h.b16 %v49
    %v79 = vpack.c.b16 %v73, %v71
    %v80 = vpack.c.b16 %v74, %v72
    %v81 = vpack.c.b16 %v77, %v75
    %v82 = vpack.c.b16 %v78, %v76
    %vm87 = vcmask 261120
    %v89 = vsel %vm87, %v66, 0
    %91 = vmatprep.subr.bf16.mxu0 %v80
    %92 = vmatpush1.bf16.msra.mxu0 %v79
    %93 = vmatprep.subr.bf16.mxu0 %v82
    %94 = vmatpush1.bf16.msra.mxu0 %v81
    %95 = vmatprep.subr.bf16.mxu0 0
    %96 = vmatpush1.bf16.msra.mxu0 0
    %97 = vmatprep.subr.bf16.mxu0 0
    %98 = vmatpush1.bf16.msra.mxu0 0
    %99 = vmatprep.subr.bf16.mxu0 0
    %100 = vmatpush1.bf16.msra.mxu0 0
    %101 = vmatprep.subr.bf16.mxu0 0
    %102 = vmatpush1.bf16.msra.mxu0 0
    %103 = vmatprep.subr.bf16.mxu0 0
    %104 = vmatpush1.bf16.msra.mxu0 0
    %105 = vmatprep.subr.bf16.mxu0 0
    %106 = vmatpush1.bf16.msra.mxu0 0
    %107 = vmatprep.subr.bf16.mxu0 0
    %108 = vmatpush1.bf16.msra.mxu0 0
    %109 = vmatprep.subr.bf16.mxu0 0
    %110 = vmatpush1.bf16.msra.mxu0 0
    %111 = vmatprep.subr.bf16.mxu0 0
    %112 = vmatpush1.bf16.msra.mxu0 0
    %113 = vmatprep.subr.bf16.mxu0 0
    %114 = vmatpush1.bf16.msra.mxu0 0
    %115 = vmatprep.subr.bf16.mxu0 0
    %116 = vmatpush1.bf16.msra.mxu0 0
    %117 = vmatprep.subr.bf16.mxu0 0
    %118 = vmatpush1.bf16.msra.mxu0 0
    %119 = vmatprep.subr.bf16.mxu0 0
    %120 = vmatpush1.bf16.msra.mxu0 0
    %121 = vmatprep.subr.bf16.mxu0 0
    %122 = vmatpush1.bf16.msra.mxu0 0
    %123 = vmatprep.mubr.bf16.mxu0 0
    %124 = vmatmul.mubr.bf16.gmra.mrb[0].mxu0 %v89
    %v125 = vpop.f32.mrb[0].mxu0
    %v126 = vadd.f32 %v55, %v125
    %v127 = vpop.f32.mrb[0].mxu0
    %v128 = vadd.f32 %v59, %v127
    %v129 = vpop.f32.mrb[0].mxu0
    %v130 = vadd.f32 %v55, %v129
    %v131 = vpop.f32.mrb[0].mxu0
    %v132 = vadd.f32 %v59, %v131
    %133 = vdwg.mxu0
    %v134 = vmul.f32 %v128, 0.5
    %v135 = vmul.f32 %v132, 0.5
    %v136 = vmul.f32 %v128, 0.044715
    %v137 = vmul.f32 %v132, 0.044715
    %v138 = vmul.f32 %v136, %v128
    %v139 = vmul.f32 %v137, %v132
    %v140 = vmul.f32 %v138, %v128
    %v141 = vmul.f32 %v139, %v132
    %v142 = vadd.f32 %v128, %v140
    %v143 = vadd.f32 %v132, %v141
    %v144 = vmul.f32 %v142, 0.7978846
    %v145 = vmul.f32 %v143, 0.7978846
    %v146 = vtanh.pop %v144
    %v147 = vtanh.pop %v145
    %v148 = vadd.f32 %v146, 1.0
    %v149 = vadd.f32 %v147, 1.0
    %v150 = vmul.f32 %v134, %v148
    %v151 = vmul.f32 %v135, %v149
    %v152 = vmul.f32 %v126, %v150
    %v153 = vmul.f32 %v130, %v151
    %154 = vst [vmem:[#allocation7] sm:$0xff] %v152
    %155 = vst [vmem:[#allocation7 + $0x8] sm:$0xff] %v153
    // Predicated region
    $region22: #{tpu_custom_call.1} parent=1 // pred_check
      _
    $region23: #{tpu_custom_call.1} parent=1 // pred_check_branch
      %157 = sbr.rel (0) target = $region25
    $region24: #{tpu_custom_call.1} parent=1 // pred_region
      %s159 = ssub.s32 256, 256
      %160 = vsyncadd [#allocation4], %s159
      %s161 = sshll.u32 [#allocation7], 4
      %s162 = int_to_ptr.vmem [resolvable:$true] %s161
      %167 = dma.vmem_to_hbm [thread:$0]  %s162, 256, %s3, [#allocation4], 128, 128, 8
    $region25: #{tpu_custom_call.1} parent=1 // pred_fallthru
      _
    // Predicated region
    $region26: #{tpu_custom_call.1} parent=1 // pred_check
      _
    $region27: #{tpu_custom_call.1} parent=1 // pred_check_branch
      %169 = sbr.rel (0) target = $region29
    $region28: #{tpu_custom_call.1} parent=1 // pred_region
      %170 = dma.done [#allocation4], 256
    $region29: #{tpu_custom_call.1} parent=1 // pred_fallthru
      _
    %171 = vsyncpa [#allocation3], 1
    %172 = vsyncpa [#allocation6], 1
    %173 = vsyncpa [#allocation4], 1

</llo_original>
